<compile_context>
chip_gen: v6e
topology: v6e:2x2x1
jax: 0.10.0
libtpu: 0.0.40
codegen_flags: <defaults>
</compile_context>

<pallas_src>
import jax
import jax.numpy as jnp
from jax.experimental import pallas as pl
from jax.experimental.pallas import tpu as pltpu


def _spatial_attention_kernel(x_ref, wcat_ref, b_ref, o_ref, ms_acc):
    """One (batch-block, channel-block) grid step.

    x_ref   : VMEM (bn, bc, HW)   channel block of x, native dtype (bf16/f32)
    wcat_ref: VMEM (2*HW, HW)     [Wmax ; Wavg/C] Toeplitz conv matrix (bf16)
    b_ref   : SMEM (1,)           conv bias
    o_ref   : VMEM (bn, 1, HW)    output block (resident across the C axis)
    ms_acc  : VMEM (bn, 2*HW)     running [channel-max | channel-sum] (f32)
    """
    HW = o_ref.shape[2]
    c_idx = pl.program_id(1)

    # Upcast per block (x stays bf16 in HBM -> half the DMA traffic).
    x = x_ref[...].astype(jnp.float32)                 # (bn, bc, HW), lane-dense
    # TODO(synk): if this ever becomes vld/VALU bound, fuse max+sum into one
    # sweep over channel chunks; while HBM-bound the second reduction is free.
    blk_max = jnp.max(x, axis=1)                       # (bn, HW)
    blk_sum = jnp.sum(x, axis=1)                       # (bn, HW)

    @pl.when(c_idx == 0)
    def _():
        ms_acc[:, :HW] = blk_max
        ms_acc[:, HW:] = blk_sum

    @pl.when(c_idx > 0)
    def _():
        ms_acc[:, :HW] = jnp.maximum(ms_acc[:, :HW], blk_max)
        ms_acc[:, HW:] = ms_acc[:, HW:] + blk_sum

    @pl.when(c_idx == pl.num_programs(1) - 1)
    def _():
        # KxK "same" conv over the 2-channel [max, mean] map as ONE MXU
        # contraction against the precomputed [Wmax ; Wavg/C] matrix: the 1/C
        # mean scale is folded into wcat, so the raw channel sum is used here.
        operand = ms_acc[...].astype(wcat_ref.dtype)   # bf16 operand, f32 acc
        logits = jnp.dot(operand, wcat_ref[...],
                         preferred_element_type=jnp.float32) + b_ref[0]
        o_ref[:, 0, :] = jax.nn.sigmoid(logits)


def _conv_matrix(w, H, W, c_total, dtype=jnp.bfloat16):
    """Expand the (1, 2, K, K) conv kernel into one (2*H*W, H*W) matrix.

    [max_flat | sum_flat] @ Wcat reproduces the 'same' Conv2d(2, 1, K,
    padding=K//2) applied to cat([max, mean], 1) (cross-correlation, zero
    padding); the 1/C mean scale is folded into the rows that multiply the
    channel sum.  Built once per call from the 2*K*K weights — weight-layout
    plumbing only, constant-folded under jit.
    """
    K = w.shape[-1]
    pad = K // 2
    wf = w.astype(jnp.float32)

    ky = jnp.arange(H)[:, None] - jnp.arange(H)[None, :] + pad   # (yin, yout)
    kx = jnp.arange(W)[:, None] - jnp.arange(W)[None, :] + pad   # (xin, xout)
    vy = (ky >= 0) & (ky < K)
    vx = (kx >= 0) & (kx < K)
    kyc = jnp.clip(ky, 0, K - 1)
    kxc = jnp.clip(kx, 0, K - 1)

    # taps[c, yin, yout, xin, xout] = w[0, c, yin - yout + pad, xin - xout + pad]
    taps = wf[0][:, kyc[:, :, None, None], kxc[None, None, :, :]]  # (2,H,H,W,W)
    mask = (vy[:, :, None, None] & vx[None, None, :, :]).astype(jnp.float32)
    taps = taps * mask[None]
    # -> (c, yin, xin, yout, xout) -> (c, H*W, H*W); rows = input pixel,
    # cols = output pixel (both row-major y*W + x).
    taps = jnp.transpose(taps, (0, 1, 3, 2, 4)).reshape(2, H * W, H * W)
    wcat = jnp.concatenate([taps[0], taps[1] * (1.0 / c_total)], axis=0)
    return wcat.astype(dtype)


def _choose_blocks(N, C, HW, itemsize, target_bytes):
    """Default (bn, bc): >=2 batch steps when possible, ~target-byte x blocks."""
    bn = N
    if N >= 2:                                  # v7x dual-TC: >= 2 parallel steps
        for d in range(N // 2, 0, -1):
            if N % d == 0:
                bn = d
                break
    if C % 8 == 0:                              # sublane-aligned channel tiles
        budget = int(target_bytes // max(1, bn * HW * itemsize)) // 8 * 8
        budget = max(8, budget)
        bc = 8
        for d in range(min(C, budget), 7, -8):
            if C % d == 0:
                bc = d
                break
    else:
        bc = C
    while bn > 1 and bn % 2 == 0 and bn * bc * HW * itemsize > 2 * target_bytes:
        bn //= 2
    return bn, bc


def spatial_attention(x, w, b, *, block_n=None, block_c=None,
                      target_block_bytes=2 << 20):
    """x: (N, C, H, W) bf16/f32; w: (1, 2, K, K); b: (1,) -> (N, 1, H, W) f32."""
    N, C, H, W = x.shape
    HW = H * W
    if HW > 4096:
        # TODO(synk): band the Toeplitz matrix (+/- (K//2)*W rows per output
        # tile) instead of the dense (2*HW, HW) expansion for large maps.
        raise NotImplementedError("dense Toeplitz path limited to H*W <= 4096")
    # TODO(synk): for deep stages with HW < 128, pack several batch rows into
    # one 128-lane row (block-diagonal Toeplitz); functional but lane-sparse
    # as written.

    itemsize = jnp.dtype(x.dtype).itemsize
    bn_d, bc_d = _choose_blocks(N, C, HW, itemsize, target_block_bytes)
    bn = bn_d if block_n is None else block_n
    bc = bc_d if block_c is None else block_c
    assert N % bn == 0, "block_n must divide N"
    assert C % bc == 0, "block_c must divide C"
    assert bc == C or bc % 8 == 0, "tiled channel block must be sublane-aligned"

    # No dtype cast here: x is DMA'd in its native dtype and upcast in-kernel.
    x_flat = x.reshape(N, C, HW)
    wcat = _conv_matrix(w, H, W, C)                    # (2*HW, HW) bf16
    b = b.astype(jnp.float32).reshape(1)

    # VMEM budget (generous): 2x input buffers + weights + output + scratch.
    x_blk = bn * bc * HW * itemsize
    w_blk = wcat.size * wcat.dtype.itemsize
    o_blk = bn * HW * 4
    s_blk = bn * 2 * HW * 4
    vmem_limit = int(2 * x_blk + 2 * w_blk + 2 * o_blk + s_blk) + (4 << 20)
    vmem_limit = min(max(vmem_limit, 8 << 20), 48 << 20)

    out = pl.pallas_call(
        _spatial_attention_kernel,
        out_shape=jax.ShapeDtypeStruct((N, 1, HW), jnp.float32),
        grid_spec=pltpu.PrefetchScalarGridSpec(
            num_scalar_prefetch=0,
            grid=(N // bn, C // bc),                   # (batch, channel-reduce)
            in_specs=[
                pl.BlockSpec((bn, bc, HW), lambda n, c: (n, c, 0)),
                # Resident conv matrix: constant index map, single-buffered.
                pl.BlockSpec((2 * HW, HW), lambda n, c: (0, 0),
                             pipeline_mode=pl.Buffered(1)),
                pl.BlockSpec(memory_space=pltpu.MemorySpace.SMEM),
            ],
            out_specs=pl.BlockSpec((bn, 1, HW), lambda n, c: (n, 0, 0)),
            scratch_shapes=[
                pltpu.VMEM((bn, 2 * HW), jnp.float32),  # [max | sum] accumulator
            ],
        ),
        compiler_params=pltpu.CompilerParams(
            # Batch blocks are independent (megacore on v7x); the channel axis
            # is a reduction carried in VMEM scratch -> "arbitrary".
            dimension_semantics=("parallel", "arbitrary"),
            vmem_limit_bytes=vmem_limit,
        ),
    )(x_flat, wcat, b)

    return out.reshape(N, 1, H, W)


def reference(x, w, b):
    """Pure-JAX reference mirroring the PyTorch SpatialAttention forward."""
    x = x.astype(jnp.float32)
    pad = w.shape[-1] // 2
    mx = jnp.max(x, axis=1, keepdims=True)
    av = jnp.mean(x, axis=1, keepdims=True)
    r = jnp.concatenate([mx, av], axis=1)
    out = jax.lax.conv_general_dilated(
        r, w.astype(jnp.float32), window_strides=(1, 1),
        padding=((pad, pad), (pad, pad)),
        dimension_numbers=("NCHW", "OIHW", "NCHW"),
        precision=jax.lax.Precision.HIGHEST)
    return jax.nn.sigmoid(out + b.reshape(1, -1, 1, 1))


if __name__ == "__main__":
    key = jax.random.PRNGKey(0)

    def check(x, w, b, name, **blocks):
        out = jax.block_until_ready(spatial_attention(x, w, b, **blocks))
        ref = reference(x, w, b)
        assert out.shape == ref.shape, (name, out.shape, ref.shape)
        err = float(jnp.max(jnp.abs(out - ref)))
        # bf16 MXU operands (f32 accumulation) vs the HIGHEST-precision XLA
        # conv reference -> small rounding mismatch; real tap/index/bias bugs
        # would produce errors orders of magnitude larger.
        assert err < 3e-3, (name, err)

    # Test 1: SpatialAttention default (kernel_size=7), bf16 activations,
    # 2-step "parallel" batch axis, single channel step (C=4).
    k1, k2, k3, key = jax.random.split(key, 4)
    N, C, H, W, K = 2, 4, 16, 16, 7
    x = jax.random.normal(k1, (N, C, H, W), jnp.float32).astype(jnp.bfloat16)
    bound = float(2 * K * K) ** -0.5       # PyTorch default U(-1/sqrt(fan_in), .)
    w = jax.random.uniform(k2, (1, 2, K, K), jnp.float32, -bound, bound)
    b = jax.random.uniform(k3, (1,), jnp.float32, -bound, bound)
    check(x, w, b, "k7_bf16")

    # Test 2: Res_Conv_Block_att usage (kernel_size=3), multi-step channel
    # reduction (block_c=8 over C=16) exercising the running-accumulator path.
    k1, k2, k3, key = jax.random.split(key, 4)
    N, C, H, W, K = 2, 16, 16, 16, 3
    x = jax.random.normal(k1, (N, C, H, W), jnp.float32)
    bound = float(2 * K * K) ** -0.5
    w = jax.random.uniform(k2, (1, 2, K, K), jnp.float32, -bound, bound)
    b = jax.random.uniform(k3, (1,), jnp.float32, -bound, bound)
    check(x, w, b, "k3_f32_tiled", block_n=1, block_c=8)

    print("KERNEL_OK")
</pallas_src>

<mosaic_0001>
module attributes {stable_mosaic.version = 11 : i64} {
  func.func @_spatial_attention_kernel(%arg0: i32, %arg1: i32, %arg2: memref<1x4x256xbf16, #tpu.memory_space<vmem>>, %arg3: memref<512x256xbf16, #tpu.memory_space<vmem>>, %arg4: memref<1xf32, #tpu.memory_space<smem>>, %arg5: memref<1x1x256xf32, #tpu.memory_space<vmem>>, %arg6: memref<1x512xf32, #tpu.memory_space<vmem>>) attributes {dimension_semantics = [#tpu.dimension_semantics<parallel>, #tpu.dimension_semantics<arbitrary>], iteration_bounds = array<i64: 2, 1>, scalar_prefetch = 0 : i64, scratch_operands = 1 : i64, tpu.core_type = #tpu.core_type<tc>, window_params = [{transform_indices = @transform_0, window_bounds = array<i64: 1, 4, 256>}, {pipeline_mode = #tpu.pipeline_mode<synchronous>, transform_indices = @transform_1, window_bounds = array<i64: 512, 256>}, {transform_indices = @transform_2, window_bounds = array<i64: 1>}, {transform_indices = @transform_3, window_bounds = array<i64: 1, 1, 256>}]} {
    %c0 = arith.constant 0 : index
    %c0_0 = arith.constant 0 : index
    %c0_1 = arith.constant 0 : index
    %0 = vector.load %arg2[%c0, %c0_0, %c0_1] : memref<1x4x256xbf16, #tpu.memory_space<vmem>>, vector<1x4x256xbf16>
    %1 = arith.extf %0 : vector<1x4x256xbf16> to vector<1x4x256xf32>
    %cst = arith.constant dense<0xFF800000> : vector<1x256xf32>
    %2 = vector.multi_reduction <maximumf>, %1, %cst [1] : vector<1x4x256xf32> to vector<1x256xf32>
    %cst_2 = arith.constant dense<0.000000e+00> : vector<1x256xf32>
    %3 = vector.multi_reduction <add>, %1, %cst_2 [1] : vector<1x4x256xf32> to vector<1x256xf32>
    %c0_i32 = arith.constant 0 : i32
    %4 = arith.cmpi eq, %arg1, %c0_i32 : i32
    %5 = arith.extui %4 : i1 to i32
    %c0_i32_3 = arith.constant 0 : i32
    %6 = arith.cmpi ne, %5, %c0_i32_3 : i32
    scf.if %6 {
      %c0_8 = arith.constant 0 : index
      %c0_9 = arith.constant 0 : index
      %13 = vector.load %arg6[%c0_8, %c0_9] : memref<1x512xf32, #tpu.memory_space<vmem>>, vector<1x256xf32>
      tpu.vector_store %arg6[%c0_8, %c0_9], %2 {strides = array<i32>} : memref<1x512xf32, #tpu.memory_space<vmem>>, vector<1x256xf32>,
      %c0_10 = arith.constant 0 : index
      %c256 = arith.constant 256 : index
      %14 = vector.load %arg6[%c0_10, %c256] : memref<1x512xf32, #tpu.memory_space<vmem>>, vector<1x256xf32>
      tpu.vector_store %arg6[%c0_10, %c256], %3 {strides = array<i32>} : memref<1x512xf32, #tpu.memory_space<vmem>>, vector<1x256xf32>,
    } else {
    }
    %c0_i32_4 = arith.constant 0 : i32
    %7 = arith.cmpi sgt, %arg1, %c0_i32_4 : i32
    %8 = arith.extui %7 : i1 to i32
    %c0_i32_5 = arith.constant 0 : i32
    %9 = arith.cmpi ne, %8, %c0_i32_5 : i32
    scf.if %9 {
      %c0_8 = arith.constant 0 : index
      %c0_9 = arith.constant 0 : index
      %13 = vector.load %arg6[%c0_8, %c0_9] : memref<1x512xf32, #tpu.memory_space<vmem>>, vector<1x256xf32>
      %14 = arith.maximumf %13, %2 : vector<1x256xf32>
      %c0_10 = arith.constant 0 : index
      %c0_11 = arith.constant 0 : index
      %15 = vector.load %arg6[%c0_10, %c0_11] : memref<1x512xf32, #tpu.memory_space<vmem>>, vector<1x256xf32>
      tpu.vector_store %arg6[%c0_10, %c0_11], %14 {strides = array<i32>} : memref<1x512xf32, #tpu.memory_space<vmem>>, vector<1x256xf32>,
      %c0_12 = arith.constant 0 : index
      %c256 = arith.constant 256 : index
      %16 = vector.load %arg6[%c0_12, %c256] : memref<1x512xf32, #tpu.memory_space<vmem>>, vector<1x256xf32>
      %17 = arith.addf %16, %3 : vector<1x256xf32>
      %c0_13 = arith.constant 0 : index
      %c256_14 = arith.constant 256 : index
      %18 = vector.load %arg6[%c0_13, %c256_14] : memref<1x512xf32, #tpu.memory_space<vmem>>, vector<1x256xf32>
      tpu.vector_store %arg6[%c0_13, %c256_14], %17 {strides = array<i32>} : memref<1x512xf32, #tpu.memory_space<vmem>>, vector<1x256xf32>,
    } else {
    }
    %c0_i32_6 = arith.constant 0 : i32
    %10 = arith.cmpi eq, %arg1, %c0_i32_6 : i32
    %11 = arith.extui %10 : i1 to i32
    %c0_i32_7 = arith.constant 0 : i32
    %12 = arith.cmpi ne, %11, %c0_i32_7 : i32
    scf.if %12 {
      %c0_8 = arith.constant 0 : index
      %c0_9 = arith.constant 0 : index
      %13 = vector.load %arg6[%c0_8, %c0_9] : memref<1x512xf32, #tpu.memory_space<vmem>>, vector<1x512xf32>
      %14 = arith.truncf %13 : vector<1x512xf32> to vector<1x512xbf16>
      %c0_10 = arith.constant 0 : index
      %c0_11 = arith.constant 0 : index
      %15 = vector.load %arg3[%c0_10, %c0_11] : memref<512x256xbf16, #tpu.memory_space<vmem>>, vector<512x256xbf16>
      %cst_12 = arith.constant dense<0.000000e+00> : vector<1x256xf32>
      %16 = tpu.matmul %14, %15, %cst_12 {dimension_numbers = #tpu.dot_dimension_numbers<[1], [0], [0], [1], [0, 0, 1, 1], [], []>} : vector<1x512xbf16>, vector<512x256xbf16>, vector<1x256xf32> -> vector<1x256xf32>
      %c0_13 = arith.constant 0 : index
      %17 = memref.load %arg4[%c0_13] : memref<1xf32, #tpu.memory_space<smem>>
      %18 = vector.broadcast %17 : f32 to vector<1x256xf32>
      %19 = arith.addf %16, %18 : vector<1x256xf32>
      %20 = arith.negf %19 : vector<1x256xf32>
      %21 = math.exp %20 : vector<1x256xf32>
      %cst_14 = arith.constant 1.000000e+00 : f32
      %22 = vector.broadcast %cst_14 : f32 to vector<1x256xf32>
      %23 = arith.addf %22, %21 : vector<1x256xf32>
      %24 = arith.divf %22, %23 : vector<1x256xf32>
      %c0_15 = arith.constant 0 : index
      %c0_16 = arith.constant 0 : index
      %c0_17 = arith.constant 0 : index
      %25 = vector.load %arg5[%c0_15, %c0_16, %c0_17] : memref<1x1x256xf32, #tpu.memory_space<vmem>>, vector<1x1x256xf32>
      %26 = vector.shape_cast %25 : vector<1x1x256xf32> to vector<1x256xf32>
      %27 = vector.shape_cast %24 : vector<1x256xf32> to vector<1x1x256xf32>
      tpu.vector_store %arg5[%c0_15, %c0_16, %c0_17], %27 {strides = array<i32>} : memref<1x1x256xf32, #tpu.memory_space<vmem>>, vector<1x1x256xf32>,
    } else {
    }
    return
  }
  func.func @transform_0(%arg0: i32, %arg1: i32) -> (i32, i32, i32) {
    %c0_i32 = arith.constant 0 : i32
    %c0_i32_0 = arith.constant 0 : i32
    return %arg0, %arg1, %c0_i32 : i32, i32, i32
  }
  func.func @transform_1(%arg0: i32, %arg1: i32) -> (i32, i32) {
    %c0_i32 = arith.constant 0 : i32
    %c0_i32_0 = arith.constant 0 : i32
    %c0_i32_1 = arith.constant 0 : i32
    return %c0_i32, %c0_i32_0 : i32, i32
  }
  func.func @transform_2(%arg0: i32, %arg1: i32) -> i32 {
    %c0_i32 = arith.constant 0 : i32
    %c0_i32_0 = arith.constant 0 : i32
    return %c0_i32 : i32
  }
  func.func @transform_3(%arg0: i32, %arg1: i32) -> (i32, i32, i32) {
    %c0_i32 = arith.constant 0 : i32
    %c0_i32_0 = arith.constant 0 : i32
    %c0_i32_1 = arith.constant 0 : i32
    return %arg0, %c0_i32, %c0_i32_0 : i32, i32, i32
  }
}

</mosaic_0001>

<llo_original>
// kernel: tpu_custom_call.1
$region0: #{tpu_custom_call.1}
  #allocation0 [shape = 'u32[]', space=smem, size = 0x4, offset = 0x4, fixed_abs, tag = 'smem constant byte address 0x4 - core index']
  #allocation1 [shape = 'u32[144,128]{1,0:T(1,128)}', space=vmem, size = 0x12000, scoped, tag = 'internal scratch']
  #allocation2 [shape = 'f32[1,512]{1,0:T(1,128)}', space=vmem, size = 0x800, scoped, tag = 'scratch operand']
  #allocation3 [shape = 'f32[1]{0:T(128)S(6)}', space=smem, size = 0x200, scoped, tag = 'scoped memory for tpu_custom_call.1']
  %s0 = inlined_call_operand.hbm [shape: bf16[2,4,256], index: 0, kind: input, shape index: {}]
  %s1 = inlined_call_operand.hbm [shape: bf16[512,256], index: 1, kind: input, shape index: {}]
  %s2 = inlined_call_operand.<no memory space> [shape: f32[1], index: 2, kind: input, shape index: {}]
  %s3 = inlined_call_operand.hbm [shape: f32[2,1,256], index: 3, kind: output, shape index: {}]
  %s4 = sld [smem:[#allocation0]]
  $region65: #{tpu_custom_call.1} parent=0
    _
  %s6 = ssub.s32 1, %s4
  %s7 = scalar_select 0, %s6, %s4
  %8 = sst [smem:[#allocation3]] %s2
  $region1: #{tpu_custom_call.1} parent=0
    #allocation4 [shape = 'u8[4096]{0}', space=vmem, size = 0x1000, scoped, tag = 'input window, operand 0']
    #allocation5 [shape = 's32[2]{0}', space=sflag, size = 0x8, scoped, tag = 'scoped memory for tpu_custom_call.1']
    #allocation6 [shape = 's32[2]{0}', space=sflag, size = 0x8, scoped, tag = 'scoped memory for tpu_custom_call.1']
    #allocation7 [shape = 'u8[262144]{0}', space=vmem, size = 0x40000, scoped, tag = 'input window, operand 1, single buffered']
    #allocation8 [shape = 's32[1]{0}', space=sflag, size = 0x4, scoped, tag = 'scoped memory for tpu_custom_call.1']
    #allocation9 [shape = 'u8[2048]{0}', space=vmem, size = 0x800, scoped, tag = 'output window, operand 0']
    %9 = vsyncpa [#allocation5], 0
    %s10 = scalar_lea.sflag [#allocation5], 1
    %11 = vsyncpa %s10, 0
    %12 = vsyncpa [#allocation8], 0
    %13 = vsyncpa [#allocation6], 0
    %s14 = scalar_lea.sflag [#allocation6], 1
    %15 = vsyncpa %s14, 0
    loop: start=0, step=1, limit=4
    $region2: #{tpu_custom_call.1} parent=1 // loop_pre_header
      _
    $region3: #{tpu_custom_call.1} parent=1 // loop_header
      %s17 = sphi 0, %s21
      %p18 = scmp.ge.s32.totalorder %s17, 4
      %s24 = sphi 0, %s36
      %s25 = sphi 0, %s32
      %s26 = sphi 0, %s24
      %s27 = sphi 0, %s25
      %s28 = sphi 0, %s26
      %s29 = sphi 0, %s27
      %s41 = sphi 0, %s43
      %s44 = sphi 0, %s41
      %s45 = sphi 0, %s44
      %s61 = sphi 0, %s45
      %s65 = sphi 0, %s65
      %s67 = sphi 0, %s65
      %s68 = sphi 0, %s67
      %s82 = sphi 0, %s68
      %s86 = sphi 0, %s86
      %s88 = sphi 0, %s86
      %s89 = sphi 0, %s88
      %s103 = sphi 0, %s89
      %s109 = sphi 0, %s111
      %s112 = sphi 0, %s109
      %s113 = sphi 0, %s112
      %s129 = sphi 0, %s113
    $region4: #{tpu_custom_call.1} parent=1 // loop_header_branch
      %20 = sbr.rel (%p18) target = $region8
    $region5: #{tpu_custom_call.1} parent=1 // loop_body
      %s22 = ssub.s32 %s17, 1
      %s23 = ssub.s32 %s17, 2
      %s30 = sadd.s32 1, %s25
      %p31 = scmp.ge.s32.totalorder %s30, 1
      %s32 = scalar_select %p31, 0, %s30
      %s33 = sadd.s32 1, %s24
      %s34 = scalar_select %p31, %s33, %s24
      %p35 = scmp.ge.s32.totalorder %s34, 2
      %s36 = scalar_select %p35, 0, %s34
      %s37 = ssub.s32 %s24, %s36
      %s38 = ssub.s32 %s25, %s32
      %s39 = sor.u32 %s37, %s38
      %p40 = scmp.eq.s32.totalorder %s39, 0
      %s42 = sadd.s32 %s41, 1
      %s43 = scalar_select %p40, %s41, %s42
      %p46 = pneg %p40
      %p47 = scmp.eq.s32.totalorder %s17, 1
      %p48 = por %p46, %p47
      %p49 = scmp.ne.s32.totalorder %s41, %s44
      %p50 = scmp.eq.s32.totalorder %s17, 0
      %p51 = por %p49, %p50
      %p52 = scmp.ne.s32.totalorder %s41, %s44
      %p53 = scmp.eq.s32.totalorder %s22, 1
      %p54 = por %p52, %p53
      %p55 = scmp.ne.s32.totalorder %s44, %s45
      %p56 = scmp.eq.s32.totalorder %s22, 0
      %p57 = por %p55, %p56
      %p58 = scmp.ne.s32.totalorder %s44, %s45
      %p59 = scmp.eq.s32.totalorder %s23, 1
      %p60 = por %p58, %p59
      %p62 = scmp.ne.s32.totalorder %s45, %s61
      %p63 = scmp.eq.s32.totalorder %s23, 0
      %p64 = por %p62, %p63
      %s66 = sadd.s32 %s65, 1
      %p69 = scmp.eq.s32.totalorder %s17, 1
      %p70 = scmp.ne.s32.totalorder %s65, %s67
      %p71 = scmp.eq.s32.totalorder %s17, 0
      %p72 = por %p70, %p71
      %p73 = scmp.ne.s32.totalorder %s65, %s67
      %p74 = scmp.eq.s32.totalorder %s22, 1
      %p75 = por %p73, %p74
      %p76 = scmp.ne.s32.totalorder %s67, %s68
      %p77 = scmp.eq.s32.totalorder %s22, 0
      %p78 = por %p76, %p77
      %p79 = scmp.ne.s32.totalorder %s67, %s68
      %p80 = scmp.eq.s32.totalorder %s23, 1
      %p81 = por %p79, %p80
      %p83 = scmp.ne.s32.totalorder %s68, %s82
      %p84 = scmp.eq.s32.totalorder %s23, 0
      %p85 = por %p83, %p84
      %s87 = sadd.s32 %s86, 1
      %p90 = scmp.eq.s32.totalorder %s17, 1
      %p91 = scmp.ne.s32.totalorder %s86, %s88
      %p92 = scmp.eq.s32.totalorder %s17, 0
      %p93 = por %p91, %p92
      %p94 = scmp.ne.s32.totalorder %s86, %s88
      %p95 = scmp.eq.s32.totalorder %s22, 1
      %p96 = por %p94, %p95
      %p97 = scmp.ne.s32.totalorder %s88, %s89
      %p98 = scmp.eq.s32.totalorder %s22, 0
      %p99 = por %p97, %p98
      %p100 = scmp.ne.s32.totalorder %s88, %s89
      %p101 = scmp.eq.s32.totalorder %s23, 1
      %p102 = por %p100, %p101
      %p104 = scmp.ne.s32.totalorder %s89, %s103
      %p105 = scmp.eq.s32.totalorder %s23, 0
      %p106 = por %p104, %p105
      %s107 = ssub.s32 %s24, %s36
      %p108 = scmp.eq.s32.totalorder %s107, 0
      %s110 = sadd.s32 %s109, 1
      %s111 = scalar_select %p108, %s109, %s110
      %p114 = pneg %p108
      %p115 = scmp.eq.s32.totalorder %s17, 1
      %p116 = por %p114, %p115
      %p117 = scmp.ne.s32.totalorder %s109, %s112
      %p118 = scmp.eq.s32.totalorder %s17, 0
      %p119 = por %p117, %p118
      %p120 = scmp.ne.s32.totalorder %s109, %s112
      %p121 = scmp.eq.s32.totalorder %s22, 1
      %p122 = por %p120, %p121
      %p123 = scmp.ne.s32.totalorder %s112, %s113
      %p124 = scmp.eq.s32.totalorder %s22, 0
      %p125 = por %p123, %p124
      %p126 = scmp.ne.s32.totalorder %s112, %s113
      %p127 = scmp.eq.s32.totalorder %s23, 1
      %p128 = por %p126, %p127
      %p130 = scmp.ne.s32.totalorder %s113, %s129
      %p131 = scmp.eq.s32.totalorder %s23, 0
      %p132 = por %p130, %p131
      %p133 = scmp.le.s32.totalorder 1, %s17
      %p134 = scmp.lt.s32.totalorder %s17, 3
      %p135 = pnand %p133, %p134
      %p136 = pneg %p135
      // Predicated region
      $region9: #{tpu_custom_call.1} parent=5 // pred_check
        _
      $region10: #{tpu_custom_call.1} parent=5 // pred_check_branch
        %138 = sbr.rel (%p135) target = $region12
      $region11: #{tpu_custom_call.1} parent=5 // pred_region
        %s139 = ssub.s32 %s17, 1
        // Predicated region
        $region13: #{tpu_custom_call.1} parent=11 // pred_check
          %p140 = pneg %p78
        $region14: #{tpu_custom_call.1} parent=11 // pred_check_branch
          %142 = sbr.rel (%p140) target = $region16
        $region15: #{tpu_custom_call.1} parent=11 // pred_region
          %s144 = ssub.s32 8192, 8192
          %145 = vsyncadd [#allocation8], %s144
          %s146 = sshll.u32 [#allocation7], 4
          %s147 = int_to_ptr.vmem [resolvable:$true] %s146
          %152 = dma.hbm_to_vmem [thread:$0]  %s1, 8192, %s147, [#allocation8], 128, 128, 8
        $region16: #{tpu_custom_call.1} parent=11 // pred_fallthru
          _
        // Predicated region
        $region17: #{tpu_custom_call.1} parent=11 // pred_check
          %p153 = pneg %p99
        $region18: #{tpu_custom_call.1} parent=11 // pred_check_branch
          %155 = sbr.rel (%p153) target = $region20
        $region19: #{tpu_custom_call.1} parent=11 // pred_region
          _
        $region20: #{tpu_custom_call.1} parent=11 // pred_fallthru
          _
      $region12: #{tpu_custom_call.1} parent=5 // pred_fallthru
        _
      %p156 = scmp.lt.s32.totalorder %s17, 2
      // Predicated region
      $region21: #{tpu_custom_call.1} parent=5 // pred_check
        %p157 = pneg %p156
      $region22: #{tpu_custom_call.1} parent=5 // pred_check_branch
        %159 = sbr.rel (%p157) target = $region24
      $region23: #{tpu_custom_call.1} parent=5 // pred_region
        // Predicated region
        $region25: #{tpu_custom_call.1} parent=23 // pred_check
          %p160 = pneg %p51
        $region26: #{tpu_custom_call.1} parent=23 // pred_check_branch
          %162 = sbr.rel (%p160) target = $region28
        $region27: #{tpu_custom_call.1} parent=23 // pred_region
          %s163 = sand.u32 %s41, 1
          %s164 = scalar_lea.sflag [#allocation5], %s163
          %s165 = sand.u32 %s41, 1
          %s166 = smul.addr %s165, 4
          %s167 = scalar_lea.vmem [#allocation4], %s166
          %s169 = ssub.s32 64, 64
          %170 = vsyncadd %s164, %s169
          %s171 = smul.addr %s25, 2
          %s172 = smul.addr %s24, 2
          %s173 = sadd.s32 %s171, %s172
          %s174 = smul.addr %s173, 32
          %s175 = scalar_lea.hbm %s0, %s174
          %s177 = sshll.u32 %s167, 4
          %s178 = int_to_ptr.vmem [resolvable:$true] %s177
          %180 = dma.hbm_to_vmem [thread:$0]  %s175, 64, %s178, %s164
        $region28: #{tpu_custom_call.1} parent=23 // pred_fallthru
          _
      $region24: #{tpu_custom_call.1} parent=5 // pred_fallthru
        _
      %p181 = scmp.le.s32.totalorder 1, %s17
      %p182 = scmp.lt.s32.totalorder %s17, 3
      %p183 = pnand %p181, %p182
      %p184 = pneg %p183
      // Predicated region
      $region29: #{tpu_custom_call.1} parent=5 // pred_check
        _
      $region30: #{tpu_custom_call.1} parent=5 // pred_check_branch
        %186 = sbr.rel (%p183) target = $region32
      $region31: #{tpu_custom_call.1} parent=5 // pred_region
        %s187 = ssub.s32 %s17, 1
        %s188 = sand.u32 %s44, 1
        %s189 = scalar_lea.sflag [#allocation5], %s188
        %s190 = sand.u32 %s44, 1
        %s191 = smul.addr %s190, 4
        %s192 = scalar_lea.vmem [#allocation4], %s191
        // Predicated region
        $region33: #{tpu_custom_call.1} parent=31 // pred_check
          %p193 = pneg %p57
        $region34: #{tpu_custom_call.1} parent=31 // pred_check_branch
          %195 = sbr.rel (%p193) target = $region36
        $region35: #{tpu_custom_call.1} parent=31 // pred_region
          %196 = dma.done %s189, 64
        $region36: #{tpu_custom_call.1} parent=31 // pred_fallthru
          _
        // Predicated region
        $region37: #{tpu_custom_call.1} parent=31 // pred_check
          %p197 = pneg %p78
        $region38: #{tpu_custom_call.1} parent=31 // pred_check_branch
          %199 = sbr.rel (%p197) target = $region40
        $region39: #{tpu_custom_call.1} parent=31 // pred_region
          %200 = dma.done [#allocation8], 8192
        $region40: #{tpu_custom_call.1} parent=31 // pred_fallthru
          _
        %s201 = sand.u32 %s44, 1
        %s202 = scalar_lea.sflag [#allocation5], %s201
        %s203 = sand.u32 %s44, 1
        %s204 = smul.addr %s203, 4
        %s205 = scalar_lea.vmem [#allocation4], %s204
        %p206 = pneg %p57
        %p207 = pneg %p54
        %p208 = pneg %p78
        %p209 = pneg %p75
        %p210 = pneg %p99
        %p211 = pneg %p96
        %p212 = pneg %p125
        %p213 = pneg %p122
        %s214 = sand.u32 %s112, 1
        %s215 = scalar_lea.sflag [#allocation6], %s214
        %s216 = sand.u32 %s112, 1
        %s217 = smul.addr %s216, 2
        %s218 = scalar_lea.vmem [#allocation9], %s217
        %v219 = vld [vmem:[%s192] sm:$0xf]
        %v220 = vunpack.c.l.bf16 %v219
        %v222 = vcombine.high %v220, %v220
        %vm224 = vcmask 1043456
        %v225 = vsel %vm224, %v220, -inf
        %v226 = vrot.slane %v225, 4
        %v227 = vmax.f32 %v225, %v226
        %v228 = vrot.slane %v227, 2
        %v229 = vmax.f32 %v227, %v228
        %v230 = vrot.slane %v229, 1
        %v231 = vmax.f32 %v229, %v230
        %v232 = vsel %vm224, %v222, -inf
        %v233 = vrot.slane %v232, 4
        %v234 = vmax.f32 %v232, %v233
        %v235 = vrot.slane %v234, 2
        %v236 = vmax.f32 %v234, %v235
        %v237 = vrot.slane %v236, 1
        %v238 = vmax.f32 %v236, %v237
        %v239 = vsel %vm224, %v220, 0.0
        %v240 = vrot.slane %v239, 4
        %v241 = vadd.f32 %v239, %v240
        %v242 = vrot.slane %v241, 2
        %v243 = vadd.f32 %v241, %v242
        %v244 = vrot.slane %v243, 1
        %v245 = vadd.f32 %v243, %v244
        %v246 = vsel %vm224, %v222, 0.0
        %v247 = vrot.slane %v246, 4
        %v248 = vadd.f32 %v246, %v247
        %v249 = vrot.slane %v248, 2
        %v250 = vadd.f32 %v248, %v249
        %v251 = vrot.slane %v250, 1
        %v252 = vadd.f32 %v250, %v251
        %p253 = scmp.eq.s32.totalorder %s27, 0
        // Predicated region
        $region41: #{tpu_custom_call.1} parent=31 // pred_check
          %p254 = pneg %p253
        $region42: #{tpu_custom_call.1} parent=31 // pred_check_branch
          %256 = sbr.rel (%p254) target = $region44
        $region43: #{tpu_custom_call.1} parent=31 // pred_region
          %v259 = vcombine.low %v231, %v238
          %v261 = vunpack.c.l.s4 1966171168
          %v262 = vunpack.c.0.s8 %v261
          %v263 = vlaneseq
          %v264 = vshrl.u32 %v263, 7
          %v265 = vsub.s32 %v262, %v264
          %v266 = vrot.slane %v259, %v265
          %v268 = vunpack.c.l.s4 1966171168
          %v269 = vunpack.c.0.s8 %v268
          %v270 = vlaneseq
          %v271 = vshrl.u32 %v270, 7
          %v272 = vsub.s32 %v269, %v271
          %v273 = vrot.slane %v266, %v272
          %v275 = vlaneseq
          %vm276 = vcmp.ge.s32.totalorder %v275, 0
          %vm277 = vcmp.lt.s32.totalorder %v275, 256
          %vm278 = vmand %vm276, %vm277
          %279 = vst.msk [vmem:[#allocation2] sm:$0x3] %vm278, %v273
          %v282 = vcombine.low %v245, %v252
          %v284 = vunpack.c.l.s4 1966171168
          %v285 = vunpack.c.0.s8 %v284
          %v286 = vlaneseq
          %v287 = vshrl.u32 %v286, 7
          %v288 = vsub.s32 %v285, %v287
          %v289 = vrot.slane %v282, %v288
          %v291 = vunpack.c.l.s4 1966171168
          %v292 = vunpack.c.0.s8 %v291
          %v293 = vlaneseq
          %v294 = vshrl.u32 %v293, 7
          %v295 = vsub.s32 %v292, %v294
          %v296 = vrot.slane %v289, %v295
          %298 = vst.msk [vmem:[#allocation2 + $0x2] sm:$0x3] %vm278, %v296
        $region44: #{tpu_custom_call.1} parent=31 // pred_fallthru
          _
        %p299 = scmp.gt.s32.totalorder %s27, 0
        // Predicated region
        $region45: #{tpu_custom_call.1} parent=31 // pred_check
          %p300 = pneg %p299
        $region46: #{tpu_custom_call.1} parent=31 // pred_check_branch
          %302 = sbr.rel (%p300) target = $region48
        $region47: #{tpu_custom_call.1} parent=31 // pred_region
          %v303 = vld [vmem:[#allocation2] sm:$0x3]
          %v306 = vcombine.low %v231, %v238
          %v308 = vunpack.c.l.s4 1966171168
          %v309 = vunpack.c.0.s8 %v308
          %v310 = vlaneseq
          %v311 = vshrl.u32 %v310, 7
          %v312 = vsub.s32 %v309, %v311
          %v313 = vrot.slane %v306, %v312
          %v315 = vunpack.c.l.s4 1966171168
          %v316 = vunpack.c.0.s8 %v315
          %v317 = vlaneseq
          %v318 = vshrl.u32 %v317, 7
          %v319 = vsub.s32 %v316, %v318
          %v320 = vrot.slane %v313, %v319
          %v322 = vmax.f32 %v303, %v320
          %v323 = vlaneseq
          %vm324 = vcmp.ge.s32.totalorder %v323, 0
          %vm325 = vcmp.lt.s32.totalorder %v323, 256
          %vm326 = vmand %vm324, %vm325
          %327 = vst.msk [vmem:[#allocation2] sm:$0x3] %vm326, %v322
          %v328 = vld [vmem:[#allocation2 + $0x2] sm:$0x3]
          %v331 = vcombine.low %v245, %v252
          %v333 = vunpack.c.l.s4 1966171168
          %v334 = vunpack.c.0.s8 %v333
          %v335 = vlaneseq
          %v336 = vshrl.u32 %v335, 7
          %v337 = vsub.s32 %v334, %v336
          %v338 = vrot.slane %v331, %v337
          %v340 = vunpack.c.l.s4 1966171168
          %v341 = vunpack.c.0.s8 %v340
          %v342 = vlaneseq
          %v343 = vshrl.u32 %v342, 7
          %v344 = vsub.s32 %v341, %v343
          %v345 = vrot.slane %v338, %v344
          %v347 = vadd.f32 %v328, %v345
          %348 = vst.msk [vmem:[#allocation2 + $0x2] sm:$0x3] %vm326, %v347
        $region48: #{tpu_custom_call.1} parent=31 // pred_fallthru
          _
        // Predicated region
        $region49: #{tpu_custom_call.1} parent=31 // pred_check
          %p349 = pneg %p253
        $region50: #{tpu_custom_call.1} parent=31 // pred_check_branch
          %351 = sbr.rel (%p349) target = $region52
        $region51: #{tpu_custom_call.1} parent=31 // pred_region
          %v352 = vld [vmem:[#allocation2] sm:$0xf]
          %v354 = vlaneseq
          %v355 = vshrl.u32 %v354, 7
          %v356 = vsub.s32 0, %v355
          %v357 = vrot.slane %v352, %v356
          %v358 = vlaneseq
          %v359 = vshrl.u32 %v358, 7
          %v360 = vsub.s32 1, %v359
          %v361 = vrot.slane %v352, %v360
          %v362 = vlaneseq
          %v363 = vshrl.u32 %v362, 7
          %v364 = vsub.s32 2, %v363
          %v365 = vrot.slane %v352, %v364
          %v366 = vlaneseq
          %v367 = vshrl.u32 %v366, 7
          %v368 = vsub.s32 3, %v367
          %v369 = vrot.slane %v352, %v368
          %v374 = vpack.c.bf16 %v357, %v357
          %v375 = vpack.c.bf16 %v361, %v361
          %v376 = vpack.c.bf16 %v365, %v365
          %v377 = vpack.c.bf16 %v369, %v369
          %v378 = vld [vmem:[#allocation7] sm:$0xff]
          %v379 = vld [vmem:[#allocation7 + $0x8] sm:$0xff]
          %v380 = vld [vmem:[#allocation7 + $0x10] sm:$0xff]
          %v381 = vld [vmem:[#allocation7 + $0x18] sm:$0xff]
          %v382 = vld [vmem:[#allocation7 + $0x20] sm:$0xff]
          %v383 = vld [vmem:[#allocation7 + $0x28] sm:$0xff]
          %v384 = vld [vmem:[#allocation7 + $0x30] sm:$0xff]
          %v385 = vld [vmem:[#allocation7 + $0x38] sm:$0xff]
          %v386 = vld [vmem:[#allocation7 + $0x40] sm:$0xff]
          %v387 = vld [vmem:[#allocation7 + $0x48] sm:$0xff]
          %v388 = vld [vmem:[#allocation7 + $0x50] sm:$0xff]
          %v389 = vld [vmem:[#allocation7 + $0x58] sm:$0xff]
          %v390 = vld [vmem:[#allocation7 + $0x60] sm:$0xff]
          %v391 = vld [vmem:[#allocation7 + $0x68] sm:$0xff]
          %v392 = vld [vmem:[#allocation7 + $0x70] sm:$0xff]
          %v393 = vld [vmem:[#allocation7 + $0x78] sm:$0xff]
          %v394 = vld [vmem:[#allocation7 + $0x80] sm:$0xff]
          %v395 = vld [vmem:[#allocation7 + $0x88] sm:$0xff]
          %v396 = vld [vmem:[#allocation7 + $0x90] sm:$0xff]
          %v397 = vld [vmem:[#allocation7 + $0x98] sm:$0xff]
          %v398 = vld [vmem:[#allocation7 + $0xa0] sm:$0xff]
          %v399 = vld [vmem:[#allocation7 + $0xa8] sm:$0xff]
          %v400 = vld [vmem:[#allocation7 + $0xb0] sm:$0xff]
          %v401 = vld [vmem:[#allocation7 + $0xb8] sm:$0xff]
          %v402 = vld [vmem:[#allocation7 + $0xc0] sm:$0xff]
          %v403 = vld [vmem:[#allocation7 + $0xc8] sm:$0xff]
          %v404 = vld [vmem:[#allocation7 + $0xd0] sm:$0xff]
          %v405 = vld [vmem:[#allocation7 + $0xd8] sm:$0xff]
          %v406 = vld [vmem:[#allocation7 + $0xe0] sm:$0xff]
          %v407 = vld [vmem:[#allocation7 + $0xe8] sm:$0xff]
          %v408 = vld [vmem:[#allocation7 + $0xf0] sm:$0xff]
          %v409 = vld [vmem:[#allocation7 + $0xf8] sm:$0xff]
          %v410 = vld [vmem:[#allocation7 + $0x100] sm:$0xff]
          %v411 = vld [vmem:[#allocation7 + $0x108] sm:$0xff]
          %v412 = vld [vmem:[#allocation7 + $0x110] sm:$0xff]
          %v413 = vld [vmem:[#allocation7 + $0x118] sm:$0xff]
          %v414 = vld [vmem:[#allocation7 + $0x120] sm:$0xff]
          %v415 = vld [vmem:[#allocation7 + $0x128] sm:$0xff]
          %v416 = vld [vmem:[#allocation7 + $0x130] sm:$0xff]
          %v417 = vld [vmem:[#allocation7 + $0x138] sm:$0xff]
          %v418 = vld [vmem:[#allocation7 + $0x140] sm:$0xff]
          %v419 = vld [vmem:[#allocation7 + $0x148] sm:$0xff]
          %v420 = vld [vmem:[#allocation7 + $0x150] sm:$0xff]
          %v421 = vld [vmem:[#allocation7 + $0x158] sm:$0xff]
          %v422 = vld [vmem:[#allocation7 + $0x160] sm:$0xff]
          %v423 = vld [vmem:[#allocation7 + $0x168] sm:$0xff]
          %v424 = vld [vmem:[#allocation7 + $0x170] sm:$0xff]
          %v425 = vld [vmem:[#allocation7 + $0x178] sm:$0xff]
          %v426 = vld [vmem:[#allocation7 + $0x180] sm:$0xff]
          %v427 = vld [vmem:[#allocation7 + $0x188] sm:$0xff]
          %v428 = vld [vmem:[#allocation7 + $0x190] sm:$0xff]
          %v429 = vld [vmem:[#allocation7 + $0x198] sm:$0xff]
          %v430 = vld [vmem:[#allocation7 + $0x1a0] sm:$0xff]
          %v431 = vld [vmem:[#allocation7 + $0x1a8] sm:$0xff]
          %v432 = vld [vmem:[#allocation7 + $0x1b0] sm:$0xff]
          %v433 = vld [vmem:[#allocation7 + $0x1b8] sm:$0xff]
          %v434 = vld [vmem:[#allocation7 + $0x1c0] sm:$0xff]
          %v435 = vld [vmem:[#allocation7 + $0x1c8] sm:$0xff]
          %v436 = vld [vmem:[#allocation7 + $0x1d0] sm:$0xff]
          %v437 = vld [vmem:[#allocation7 + $0x1d8] sm:$0xff]
          %v438 = vld [vmem:[#allocation7 + $0x1e0] sm:$0xff]
          %v439 = vld [vmem:[#allocation7 + $0x1e8] sm:$0xff]
          %v440 = vld [vmem:[#allocation7 + $0x1f0] sm:$0xff]
          %v441 = vld [vmem:[#allocation7 + $0x1f8] sm:$0xff]
          %s442 = sld [smem:[#allocation3]]
          %v443 = vstv %s442
          %v508 = vunpack.c.l.b16 %v378
          %v509 = vunpack.c.h.b16 %v378
          %v510 = vunpack.c.l.b16 %v379
          %v511 = vunpack.c.h.b16 %v379
          %v512 = vunpack.c.l.b16 %v380
          %v513 = vunpack.c.h.b16 %v380
          %v514 = vunpack.c.l.b16 %v381
          %v515 = vunpack.c.h.b16 %v381
          %v516 = vunpack.c.l.b16 %v382
          %v517 = vunpack.c.h.b16 %v382
          %v518 = vunpack.c.l.b16 %v383
          %v519 = vunpack.c.h.b16 %v383
          %v520 = vunpack.c.l.b16 %v384
          %v521 = vunpack.c.h.b16 %v384
          %v522 = vunpack.c.l.b16 %v385
          %v523 = vunpack.c.h.b16 %v385
          %v524 = vunpack.c.l.b16 %v386
          %v525 = vunpack.c.h.b16 %v386
          %v526 = vunpack.c.l.b16 %v387
          %v527 = vunpack.c.h.b16 %v387
          %v528 = vunpack.c.l.b16 %v388
          %v529 = vunpack.c.h.b16 %v388
          %v530 = vunpack.c.l.b16 %v389
          %v531 = vunpack.c.h.b16 %v389
          %v532 = vunpack.c.l.b16 %v390
          %v533 = vunpack.c.h.b16 %v390
          %v534 = vunpack.c.l.b16 %v391
          %v535 = vunpack.c.h.b16 %v391
          %v536 = vunpack.c.l.b16 %v392
          %v537 = vunpack.c.h.b16 %v392
          %v538 = vunpack.c.l.b16 %v393
          %v539 = vunpack.c.h.b16 %v393
          %v540 = vunpack.c.l.b16 %v394
          %v541 = vunpack.c.h.b16 %v394
          %v542 = vunpack.c.l.b16 %v395
          %v543 = vunpack.c.h.b16 %v395
          %v544 = vunpack.c.l.b16 %v396
          %v545 = vunpack.c.h.b16 %v396
          %v546 = vunpack.c.l.b16 %v397
          %v547 = vunpack.c.h.b16 %v397
          %v548 = vunpack.c.l.b16 %v398
          %v549 = vunpack.c.h.b16 %v398
          %v550 = vunpack.c.l.b16 %v399
          %v551 = vunpack.c.h.b16 %v399
          %v552 = vunpack.c.l.b16 %v400
          %v553 = vunpack.c.h.b16 %v400
          %v554 = vunpack.c.l.b16 %v401
          %v555 = vunpack.c.h.b16 %v401
          %v556 = vunpack.c.l.b16 %v402
          %v557 = vunpack.c.h.b16 %v402
          %v558 = vunpack.c.l.b16 %v403
          %v559 = vunpack.c.h.b16 %v403
          %v560 = vunpack.c.l.b16 %v404
          %v561 = vunpack.c.h.b16 %v404
          %v562 = vunpack.c.l.b16 %v405
          %v563 = vunpack.c.h.b16 %v405
          %v564 = vunpack.c.l.b16 %v406
          %v565 = vunpack.c.h.b16 %v406
          %v566 = vunpack.c.l.b16 %v407
          %v567 = vunpack.c.h.b16 %v407
          %v568 = vunpack.c.l.b16 %v408
          %v569 = vunpack.c.h.b16 %v408
          %v570 = vunpack.c.l.b16 %v409
          %v571 = vunpack.c.h.b16 %v409
          %v572 = vunpack.c.l.b16 %v410
          %v573 = vunpack.c.h.b16 %v410
          %v574 = vunpack.c.l.b16 %v411
          %v575 = vunpack.c.h.b16 %v411
          %v576 = vunpack.c.l.b16 %v412
          %v577 = vunpack.c.h.b16 %v412
          %v578 = vunpack.c.l.b16 %v413
          %v579 = vunpack.c.h.b16 %v413
          %v580 = vunpack.c.l.b16 %v414
          %v581 = vunpack.c.h.b16 %v414
          %v582 = vunpack.c.l.b16 %v415
          %v583 = vunpack.c.h.b16 %v415
          %v584 = vunpack.c.l.b16 %v416
          %v585 = vunpack.c.h.b16 %v416
          %v586 = vunpack.c.l.b16 %v417
          %v587 = vunpack.c.h.b16 %v417
          %v588 = vunpack.c.l.b16 %v418
          %v589 = vunpack.c.h.b16 %v418
          %v590 = vunpack.c.l.b16 %v419
          %v591 = vunpack.c.h.b16 %v419
          %v592 = vunpack.c.l.b16 %v420
          %v593 = vunpack.c.h.b16 %v420
          %v594 = vunpack.c.l.b16 %v421
          %v595 = vunpack.c.h.b16 %v421
          %v596 = vunpack.c.l.b16 %v422
          %v597 = vunpack.c.h.b16 %v422
          %v598 = vunpack.c.l.b16 %v423
          %v599 = vunpack.c.h.b16 %v423
          %v600 = vunpack.c.l.b16 %v424
          %v601 = vunpack.c.h.b16 %v424
          %v602 = vunpack.c.l.b16 %v425
          %v603 = vunpack.c.h.b16 %v425
          %v604 = vunpack.c.l.b16 %v426
          %v605 = vunpack.c.h.b16 %v426
          %v606 = vunpack.c.l.b16 %v427
          %v607 = vunpack.c.h.b16 %v427
          %v608 = vunpack.c.l.b16 %v428
          %v609 = vunpack.c.h.b16 %v428
          %v610 = vunpack.c.l.b16 %v429
          %v611 = vunpack.c.h.b16 %v429
          %v612 = vunpack.c.l.b16 %v430
          %v613 = vunpack.c.h.b16 %v430
          %v614 = vunpack.c.l.b16 %v431
          %v615 = vunpack.c.h.b16 %v431
          %v616 = vunpack.c.l.b16 %v432
          %v617 = vunpack.c.h.b16 %v432
          %v618 = vunpack.c.l.b16 %v433
          %v619 = vunpack.c.h.b16 %v433
          %v620 = vunpack.c.l.b16 %v434
          %v621 = vunpack.c.h.b16 %v434
          %v622 = vunpack.c.l.b16 %v435
          %v623 = vunpack.c.h.b16 %v435
          %v624 = vunpack.c.l.b16 %v436
          %v625 = vunpack.c.h.b16 %v436
          %v626 = vunpack.c.l.b16 %v437
          %v627 = vunpack.c.h.b16 %v437
          %v628 = vunpack.c.l.b16 %v438
          %v629 = vunpack.c.h.b16 %v438
          %v630 = vunpack.c.l.b16 %v439
          %v631 = vunpack.c.h.b16 %v439
          %v632 = vunpack.c.l.b16 %v440
          %v633 = vunpack.c.h.b16 %v440
          %v634 = vunpack.c.l.b16 %v441
          %v635 = vunpack.c.h.b16 %v441
          %v636 = vpack.c.b16 %v510, %v508
          %v637 = vpack.c.b16 %v511, %v509
          %v638 = vpack.c.b16 %v514, %v512
          %v639 = vpack.c.b16 %v515, %v513
          %v640 = vpack.c.b16 %v518, %v516
          %v641 = vpack.c.b16 %v519, %v517
          %v642 = vpack.c.b16 %v522, %v520
          %v643 = vpack.c.b16 %v523, %v521
          %v644 = vpack.c.b16 %v526, %v524
          %v645 = vpack.c.b16 %v527, %v525
          %v646 = vpack.c.b16 %v530, %v528
          %v647 = vpack.c.b16 %v531, %v529
          %v648 = vpack.c.b16 %v534, %v532
          %v649 = vpack.c.b16 %v535, %v533
          %v650 = vpack.c.b16 %v538, %v536
          %v651 = vpack.c.b16 %v539, %v537
          %v652 = vpack.c.b16 %v542, %v540
          %v653 = vpack.c.b16 %v543, %v541
          %v654 = vpack.c.b16 %v546, %v544
          %v655 = vpack.c.b16 %v547, %v545
          %v656 = vpack.c.b16 %v550, %v548
          %v657 = vpack.c.b16 %v551, %v549
          %v658 = vpack.c.b16 %v554, %v552
          %v659 = vpack.c.b16 %v555, %v553
          %v660 = vpack.c.b16 %v558, %v556
          %v661 = vpack.c.b16 %v559, %v557
          %v662 = vpack.c.b16 %v562, %v560
          %v663 = vpack.c.b16 %v563, %v561
          %v664 = vpack.c.b16 %v566, %v564
          %v665 = vpack.c.b16 %v567, %v565
          %v666 = vpack.c.b16 %v570, %v568
          %v667 = vpack.c.b16 %v571, %v569
          %v668 = vpack.c.b16 %v574, %v572
          %v669 = vpack.c.b16 %v575, %v573
          %v670 = vpack.c.b16 %v578, %v576
          %v671 = vpack.c.b16 %v579, %v577
          %v672 = vpack.c.b16 %v582, %v580
          %v673 = vpack.c.b16 %v583, %v581
          %v674 = vpack.c.b16 %v586, %v584
          %v675 = vpack.c.b16 %v587, %v585
          %v676 = vpack.c.b16 %v590, %v588
          %v677 = vpack.c.b16 %v591, %v589
          %v678 = vpack.c.b16 %v594, %v592
          %v679 = vpack.c.b16 %v595, %v593
          %v680 = vpack.c.b16 %v598, %v596
          %v681 = vpack.c.b16 %v599, %v597
          %v682 = vpack.c.b16 %v602, %v600
          %v683 = vpack.c.b16 %v603, %v601
          %v684 = vpack.c.b16 %v606, %v604
          %v685 = vpack.c.b16 %v607, %v605
          %v686 = vpack.c.b16 %v610, %v608
          %v687 = vpack.c.b16 %v611, %v609
          %v688 = vpack.c.b16 %v614, %v612
          %v689 = vpack.c.b16 %v615, %v613
          %v690 = vpack.c.b16 %v618, %v616
          %v691 = vpack.c.b16 %v619, %v617
          %v692 = vpack.c.b16 %v622, %v620
          %v693 = vpack.c.b16 %v623, %v621
          %v694 = vpack.c.b16 %v626, %v624
          %v695 = vpack.c.b16 %v627, %v625
          %v696 = vpack.c.b16 %v630, %v628
          %v697 = vpack.c.b16 %v631, %v629
          %v698 = vpack.c.b16 %v634, %v632
          %v699 = vpack.c.b16 %v635, %v633
          %764 = vmatprep.subr.bf16.mxu0 %v651
          %765 = vmatpush1.bf16.msra.mxu0 %v650
          %766 = vmatprep.subr.bf16.mxu0 %v649
          %767 = vmatpush1.bf16.msra.mxu0 %v648
          %768 = vmatprep.subr.bf16.mxu0 %v647
          %769 = vmatpush1.bf16.msra.mxu0 %v646
          %770 = vmatprep.subr.bf16.mxu0 %v645
          %771 = vmatpush1.bf16.msra.mxu0 %v644
          %772 = vmatprep.subr.bf16.mxu0 %v643
          %773 = vmatpush1.bf16.msra.mxu0 %v642
          %774 = vmatprep.subr.bf16.mxu0 %v641
          %775 = vmatpush1.bf16.msra.mxu0 %v640
          %776 = vmatprep.subr.bf16.mxu0 %v639
          %777 = vmatpush1.bf16.msra.mxu0 %v638
          %778 = vmatprep.subr.bf16.mxu0 %v637
          %779 = vmatpush1.bf16.msra.mxu0 %v636
          %780 = vmatprep.subr.bf16.mxu0 %v667
          %781 = vmatpush2.bf16.msra.mxu0 %v666
          %782 = vmatprep.subr.bf16.mxu0 %v665
          %783 = vmatpush2.bf16.msra.mxu0 %v664
          %784 = vmatprep.subr.bf16.mxu0 %v663
          %785 = vmatpush2.bf16.msra.mxu0 %v662
          %786 = vmatprep.subr.bf16.mxu0 %v661
          %787 = vmatpush2.bf16.msra.mxu0 %v660
          %788 = vmatprep.subr.bf16.mxu0 %v659
          %789 = vmatpush2.bf16.msra.mxu0 %v658
          %790 = vmatprep.subr.bf16.mxu0 %v657
          %791 = vmatpush2.bf16.msra.mxu0 %v656
          %792 = vmatprep.subr.bf16.mxu0 %v655
          %793 = vmatpush2.bf16.msra.mxu0 %v654
          %794 = vmatprep.subr.bf16.mxu0 %v653
          %795 = vmatpush2.bf16.msra.mxu0 %v652
          %796 = vmatprep.mubr.bf16.mxu0 %v375
          %797 = vmatmul.mubr.bf16.gmra.mxu0 %v374
          %v798 = vpop.f32.mrf.mxu0
          %v799 = vadd.f32 %v443, %v798
          %v800 = vpop.f32.mrf.mxu0
          %v801 = vadd.f32 %v443, %v800
          %v802 = vpop.f32.mrf.mxu0
          %v803 = vpop.f32.mrf.mxu0
          %804 = vdwg.mxu0
          %805 = vmatprep.subr.bf16.mxu0 %v683
          %806 = vmatpush1.bf16.msra.mxu0 %v682
          %807 = vmatprep.subr.bf16.mxu0 %v681
          %808 = vmatpush1.bf16.msra.mxu0 %v680
          %809 = vmatprep.subr.bf16.mxu0 %v679
          %810 = vmatpush1.bf16.msra.mxu0 %v678
          %811 = vmatprep.subr.bf16.mxu0 %v677
          %812 = vmatpush1.bf16.msra.mxu0 %v676
          %813 = vmatprep.subr.bf16.mxu0 %v675
          %814 = vmatpush1.bf16.msra.mxu0 %v674
          %815 = vmatprep.subr.bf16.mxu0 %v673
          %816 = vmatpush1.bf16.msra.mxu0 %v672
          %817 = vmatprep.subr.bf16.mxu0 %v671
          %818 = vmatpush1.bf16.msra.mxu0 %v670
          %819 = vmatprep.subr.bf16.mxu0 %v669
          %820 = vmatpush1.bf16.msra.mxu0 %v668
          %821 = vmatprep.subr.bf16.mxu0 %v699
          %822 = vmatpush2.bf16.msra.mxu0 %v698
          %823 = vmatprep.subr.bf16.mxu0 %v697
          %824 = vmatpush2.bf16.msra.mxu0 %v696
          %825 = vmatprep.subr.bf16.mxu0 %v695
          %826 = vmatpush2.bf16.msra.mxu0 %v694
          %827 = vmatprep.subr.bf16.mxu0 %v693
          %828 = vmatpush2.bf16.msra.mxu0 %v692
          %829 = vmatprep.subr.bf16.mxu0 %v691
          %830 = vmatpush2.bf16.msra.mxu0 %v690
          %831 = vmatprep.subr.bf16.mxu0 %v689
          %832 = vmatpush2.bf16.msra.mxu0 %v688
          %833 = vmatprep.subr.bf16.mxu0 %v687
          %834 = vmatpush2.bf16.msra.mxu0 %v686
          %835 = vmatprep.subr.bf16.mxu0 %v685
          %836 = vmatpush2.bf16.msra.mxu0 %v684
          %837 = vmatprep.mubr.bf16.mxu0 %v377
          %838 = vmatmul.mubr.bf16.gmra.mxu0 %v376
          %v839 = vpop.f32.mrf.mxu0
          %v840 = vadd.f32 %v799, %v839
          %v841 = vpop.f32.mrf.mxu0
          %v842 = vadd.f32 %v801, %v841
          %v843 = vpop.f32.mrf.mxu0
          %v844 = vpop.f32.mrf.mxu0
          %845 = vdwg.mxu0
          %v846 = vxor.u32 %v840, 2147483648
          %v847 = vxor.u32 %v842, 2147483648
          %v848 = vmul.f32 %v846, 1.442695
          %v849 = vpow.pop %v848
          %v850 = vmul.f32 %v847, 1.442695
          %v851 = vpow.pop %v850
          %v852 = vadd.f32 %v849, 1.0
          %v853 = vadd.f32 %v851, 1.0
          %v854 = vrcp.pop %v852
          %v855 = vmul.f32 1.0, %v854
          %v856 = vrcp.pop %v853
          %v857 = vmul.f32 1.0, %v856
          %v860 = vcombine.low %v855, %v857
          %v862 = vunpack.c.l.s4 1966171168
          %v863 = vunpack.c.0.s8 %v862
          %v864 = vlaneseq
          %v865 = vshrl.u32 %v864, 7
          %v866 = vsub.s32 %v863, %v865
          %v867 = vrot.slane %v860, %v866
          %v869 = vunpack.c.l.s4 1966171168
          %v870 = vunpack.c.0.s8 %v869
          %v871 = vlaneseq
          %v872 = vshrl.u32 %v871, 7
          %v873 = vsub.s32 %v870, %v872
          %v874 = vrot.slane %v867, %v873
          %v876 = vlaneseq
          %vm877 = vcmp.ge.s32.totalorder %v876, 0
          %vm878 = vcmp.lt.s32.totalorder %v876, 256
          %vm879 = vmand %vm877, %vm878
          %880 = vst.msk [vmem:[%s218] sm:$0x3] %vm879, %v874
        $region52: #{tpu_custom_call.1} parent=31 // pred_fallthru
          _
        %s881 = sand.u32 %s112, 1
        %s882 = scalar_lea.sflag [#allocation6], %s881
        %s883 = sand.u32 %s112, 1
        %s884 = smul.addr %s883, 2
        %s885 = scalar_lea.vmem [#allocation9], %s884
        // Predicated region
        $region53: #{tpu_custom_call.1} parent=31 // pred_check
          %p886 = pneg %p122
        $region54: #{tpu_custom_call.1} parent=31 // pred_check_branch
          %888 = sbr.rel (%p886) target = $region56
        $region55: #{tpu_custom_call.1} parent=31 // pred_region
          %s890 = ssub.s32 32, 32
          %891 = vsyncadd %s882, %s890
          %s892 = smul.addr %s26, 2
          %s893 = smul.addr %s892, 16
          %s894 = scalar_lea.hbm %s3, %s893
          %s896 = sshll.u32 %s885, 4
          %s897 = int_to_ptr.vmem [resolvable:$true] %s896
          %899 = dma.vmem_to_hbm [thread:$0]  %s897, 32, %s894, %s882
        $region56: #{tpu_custom_call.1} parent=31 // pred_fallthru
          _
      $region32: #{tpu_custom_call.1} parent=5 // pred_fallthru
        _
      %p900 = scmp.le.s32.totalorder 2, %s17
      // Predicated region
      $region57: #{tpu_custom_call.1} parent=5 // pred_check
        %p901 = pneg %p900
      $region58: #{tpu_custom_call.1} parent=5 // pred_check_branch
        %903 = sbr.rel (%p901) target = $region60
      $region59: #{tpu_custom_call.1} parent=5 // pred_region
        %s904 = ssub.s32 %s17, 2
        // Predicated region
        $region61: #{tpu_custom_call.1} parent=59 // pred_check
          %p905 = pneg %p128
        $region62: #{tpu_custom_call.1} parent=59 // pred_check_branch
          %907 = sbr.rel (%p905) target = $region64
        $region63: #{tpu_custom_call.1} parent=59 // pred_region
          %s908 = sand.u32 %s113, 1
          %s909 = scalar_lea.sflag [#allocation6], %s908
          %s910 = sand.u32 %s113, 1
          %s911 = smul.addr %s910, 2
          %s912 = scalar_lea.vmem [#allocation9], %s911
          %913 = dma.done %s909, 32
        $region64: #{tpu_custom_call.1} parent=59 // pred_fallthru
          _
      $region60: #{tpu_custom_call.1} parent=5 // pred_fallthru
        _
    $region6: #{tpu_custom_call.1} parent=1 // loop_footer
      %s21 = sadd.s32 1, %s17
    $region7: #{tpu_custom_call.1} parent=1 // loop_footer_branch
      %16 = sbr.rel target = $region3
    $region8: #{tpu_custom_call.1} parent=1 // loop_exit
      _
    %914 = vsyncpa [#allocation5], 1
    %s915 = scalar_lea.sflag [#allocation5], 1
    %916 = vsyncpa %s915, 1
    %917 = vsyncpa [#allocation8], 1
    %918 = vsyncpa [#allocation6], 1
    %s919 = scalar_lea.sflag [#allocation6], 1
    %920 = vsyncpa %s919, 1

</llo_original>
